<compile_context>
chip_gen: v7x
topology: tpu7x:2x2x1
jax: 0.10.0
libtpu: 0.0.40
codegen_flags: <defaults>
</compile_context>

<pallas_src>
import numpy as np
import jax
import jax.numpy as jnp
from jax.experimental import pallas as pl
from jax.experimental.pallas import tpu as pltpu


def _round_up(x, m):
    return ((x + m - 1) // m) * m


def _pick_tile(padded_dim, cap):
    """Largest multiple of 128 that divides padded_dim (a multiple of 128) and
    is <= cap (cap >= 128)."""
    k = padded_dim // 128
    best = 1
    for d in range(1, max(1, cap // 128) + 1):
        if d <= k and k % d == 0:
            best = d
    return best * 128


# ------------------------- fused-split matmul kernels -------------------------

def _fused_split_kernel_k1(x_ref, ht_ref, yp_ref, yn_ref):
    # Whole reduction fits one tile: no scratch accumulator, no pl.when.
    x = x_ref[...]
    h = ht_ref[...]
    yp = jnp.dot(x, jnp.maximum(h, 0), preferred_element_type=jnp.float32)
    yh = jnp.dot(x, h, preferred_element_type=jnp.float32)
    yp_ref[...] = yp.astype(yp_ref.dtype)
    # relu(-h) == relu(h) - h  =>  y_neg = y_pos - x @ h
    yn_ref[...] = (yp - yh).astype(yn_ref.dtype)


def _fused_split_kernel(x_ref, ht_ref, yp_ref, yn_ref, accp_ref, acch_ref):
    # grid = (Bp//tm, Mp//tn, Np//tk); reduction axis (k) is last.
    @pl.when(pl.program_id(2) == 0)
    def _():
        accp_ref[...] = jnp.zeros_like(accp_ref)
        acch_ref[...] = jnp.zeros_like(acch_ref)

    x = x_ref[...]
    h = ht_ref[...]
    # Single relu on the weight tile (VPU); two MXU matmuls, f32 accumulate.
    accp_ref[...] += jnp.dot(x, jnp.maximum(h, 0),
                             preferred_element_type=jnp.float32)
    acch_ref[...] += jnp.dot(x, h, preferred_element_type=jnp.float32)

    @pl.when(pl.program_id(2) == pl.num_programs(2) - 1)
    def _():
        yp = accp_ref[...]
        yp_ref[...] = yp.astype(yp_ref.dtype)
        yn_ref[...] = (yp - acch_ref[...]).astype(yn_ref.dtype)


# ------------------------------- host wrapper -------------------------------

def linear_split_forward(x, Ht_padded, m_out, *, tm=None, tn=None, tk=None,
                         interleave=True):
    """y = x @ P.T with P = interleave(relu(H), relu(-H)).

    Ht_padded is H.T zero-padded (once, at construction) to (Np, Mp), both
    multiples of 128.  m_out is the true (unpadded) M.
    """
    B, N = x.shape
    Np, Mp = Ht_padded.shape
    assert Np >= N and Np % 128 == 0 and Mp % 128 == 0, (Ht_padded.shape, N)

    x_dtype = x.dtype
    w_dtype = Ht_padded.dtype
    xb = jnp.dtype(x_dtype).itemsize
    wb = jnp.dtype(w_dtype).itemsize

    auto_tm, auto_tn = tm is None, tn is None

    # --- tile selection --------------------------------------------------
    # bf16 packs 16 rows per vreg sublane-wise; keep LHS tiles full.
    row_align = 16 if jnp.dtype(x_dtype) == jnp.dtype(jnp.bfloat16) else 8
    if tm is None:
        # Cover the whole batch (up to 512 rows) so H^T streams from HBM
        # exactly once -- this layer is weight-bandwidth bound for typical B.
        tm = min(_round_up(B, row_align), 512)
    if tn is None:
        tn = _pick_tile(Mp, 1024)
    if tk is None:
        tk = _pick_tile(Np, 1024)
    assert Mp % tn == 0 and Np % tk == 0, "tn/tk must divide the padded dims"

    Bp = _round_up(B, tm)

    # Ensure >= 2 blocks on the parallel axes when possible (v7x: 2 TCs/chip).
    if (Bp // tm) * (Mp // tn) < 2:
        if auto_tn and Mp // 128 >= 2:
            tn = _pick_tile(Mp, max(128, tn // 2))
        elif auto_tm and tm > row_align and B > row_align:
            tm = max(row_align, _round_up(tm // 2, row_align))
            Bp = _round_up(B, tm)

    # --- honest VMEM accounting (budget safe for v7x's 64 MiB VMEM) ------
    def vmem_bytes(tm_, tn_, tk_):
        in_buf = 2 * (tm_ * tk_ * xb + tk_ * tn_ * wb)   # double-buffered inputs
        out_buf = 2 * 2 * tm_ * tn_ * 4                  # two f32 out slabs, DB
        acc = 2 * tm_ * tn_ * 4                          # f32 accumulators
        tmp = tk_ * tn_ * wb + tm_ * tn_ * 4             # relu(Ht) temp + finalize
        return in_buf + out_buf + acc + tmp

    budget = 48 << 20
    while vmem_bytes(tm, tn, tk) > budget:
        if tk > 128:
            tk = _pick_tile(Np, max(128, tk // 2))
        elif tn > 128:
            tn = _pick_tile(Mp, max(128, tn // 2))
        elif tm > row_align:
            tm = max(row_align, tm // 2)
            Bp = _round_up(B, tm)
        else:
            break

    # Pad activations only (cheap; zero-padding along K is exact: relu(0)=0).
    if Bp != B or Np != N:
        x = jnp.pad(x, ((0, Bp - B), (0, Np - N)))

    grid = (Bp // tm, Mp // tn, Np // tk)
    k_steps = grid[2]

    vmem_est = vmem_bytes(tm, tn, tk)
    vmem_limit = int(min(max(vmem_est + (8 << 20), 32 << 20), 64 << 20))

    if k_steps == 1:
        kernel = _fused_split_kernel_k1
        scratch = []
    else:
        kernel = _fused_split_kernel
        scratch = [pltpu.VMEM((tm, tn), jnp.float32),
                   pltpu.VMEM((tm, tn), jnp.float32)]

    cost = pl.CostEstimate(
        flops=int(4 * Bp * Mp * Np),          # two MXU matmuls per output tile
        transcendentals=0,
        bytes_accessed=int(Bp * Np * xb + Np * Mp * wb + 2 * Bp * Mp * 4),
    )

    y_pos, y_neg = pl.pallas_call(
        kernel,
        out_shape=(jax.ShapeDtypeStruct((Bp, Mp), jnp.float32),
                   jax.ShapeDtypeStruct((Bp, Mp), jnp.float32)),
        grid_spec=pltpu.PrefetchScalarGridSpec(
            num_scalar_prefetch=0,
            grid=grid,
            in_specs=[
                pl.BlockSpec((tm, tk), lambda i, j, k: (i, k)),   # x tile
                pl.BlockSpec((tk, tn), lambda i, j, k: (k, j)),   # H^T tile
            ],
            out_specs=[
                pl.BlockSpec((tm, tn), lambda i, j, k: (i, j)),   # y_pos slab
                pl.BlockSpec((tm, tn), lambda i, j, k: (i, j)),   # y_neg slab
            ],
            scratch_shapes=scratch,
        ),
        compiler_params=pltpu.CompilerParams(
            dimension_semantics=("parallel", "parallel", "arbitrary"),
            vmem_limit_bytes=vmem_limit,
        ),
        cost_estimate=cost,
    )(x, Ht_padded)

    y_pos = y_pos[:B, :m_out]
    y_neg = y_neg[:B, :m_out]
    if not interleave:
        return y_pos, y_neg
    # Interleave the lane-dense slabs in the wrapper: y[:,0::2]=pos, y[:,1::2]=neg.
    return jnp.stack([y_pos, y_neg], axis=-1).reshape(B, 2 * m_out)


# ------------------------- module-equivalent setup -------------------------

class LinearSplitPallas:
    """JAX/Pallas equivalent of spyrit LinearSplit (forward path only)."""

    # TODO(synk): adjoint()/pinv() paths (H^T / np.linalg.pinv matmuls) are
    # host-side setup + plain GEMMs; not kernelized here.

    def __init__(self, H, weight_dtype=jnp.float32, cast_activations=None):
        H = jnp.asarray(H, dtype=jnp.float32)
        self.M, self.N = H.shape
        self.H = H
        self.weight_dtype = weight_dtype
        # bf16 activations lose input precision; only cast them by default
        # when the weights are bf16 (bf16 MXU path -- the best option on v5e).
        if cast_activations is None:
            cast_activations = jnp.dtype(weight_dtype) == jnp.dtype(jnp.bfloat16)
        self.cast_activations = cast_activations
        # Pad H^T ONCE at construction (static weight).  The (2M, N) split
        # matrix P is never materialized -- the relu split is fused in-kernel.
        Np = _round_up(self.N, 128)
        Mp = _round_up(self.M, 128)
        Ht = H.T.astype(weight_dtype)
        self.Ht_padded = jnp.pad(Ht, ((0, Np - self.N), (0, Mp - self.M)))

    def forward(self, x, **kwargs):
        x = jnp.asarray(x, dtype=jnp.float32)
        if self.cast_activations and \
                jnp.dtype(self.weight_dtype) == jnp.dtype(jnp.bfloat16):
            x = x.astype(jnp.bfloat16)
        return linear_split_forward(x, self.Ht_padded, self.M, **kwargs)

    def forward_H(self, x):
        # Reference path (glue, not the hot path): (B, N) -> (B, M).
        return jnp.asarray(x, jnp.float32) @ self.H.T

    def get_P(self):
        # Reference split matrix (testing only; the kernel never builds it).
        H_pos = jnp.maximum(self.H, 0.0)
        H_neg = jnp.maximum(-self.H, 0.0)
        P = jnp.zeros((2 * self.M, self.N), dtype=jnp.float32)
        P = P.at[0::2, :].set(H_pos)
        P = P.at[1::2, :].set(H_neg)
        return P


# ------------------------------- main ----------------------------------

if __name__ == "__main__":
    # Small, square-image-consistent sizes: 16x16 image -> N = 256, M = 64.
    B, M, img = 8, 64, 16
    N = img * img

    key = jax.random.PRNGKey(0)
    k_h, k_x = jax.random.split(key)
    # H has mixed signs so the +/- split is non-trivial.
    H = jax.random.normal(k_h, (M, N), dtype=jnp.float32)
    x = jax.random.normal(k_x, (B, N), dtype=jnp.float32)

    op = LinearSplitPallas(H)

    # Default (adaptive) tiles: single K step -> scratch-free kernel path.
    y = jax.block_until_ready(op.forward(x))
    P = op.get_P()
    y_ref = x @ P.T
    assert y.shape == (B, 2 * M), y.shape
    assert y.dtype == jnp.float32
    np.testing.assert_allclose(np.asarray(y), np.asarray(y_ref),
                               rtol=1e-4, atol=1e-4)

    # Exercise the multi-K-step (accumulator) kernel path with explicit tiles.
    y2 = jax.block_until_ready(op.forward(x, tm=8, tn=128, tk=128))
    np.testing.assert_allclose(np.asarray(y2), np.asarray(y_ref),
                               rtol=1e-4, atol=1e-4)

    # Non-interleaved slabs (consumer-side fusion option).
    yp, yn = op.forward(x, interleave=False)
    jax.block_until_ready((yp, yn))
    np.testing.assert_allclose(np.asarray(yp), np.asarray(y_ref[:, 0::2]),
                               rtol=1e-4, atol=1e-4)
    np.testing.assert_allclose(np.asarray(yn), np.asarray(y_ref[:, 1::2]),
                               rtol=1e-4, atol=1e-4)

    # bf16-weight + bf16-activation variant (v5e MXU path; halved weight HBM
    # traffic, f32 MXU accumulation, looser tolerance).
    op_bf16 = LinearSplitPallas(H, weight_dtype=jnp.bfloat16)
    y3 = jax.block_until_ready(op_bf16.forward(x))
    np.testing.assert_allclose(np.asarray(y3), np.asarray(y_ref),
                               rtol=5e-2, atol=5e-1)

    print("KERNEL_OK")
</pallas_src>

<mosaic_0001>
module attributes {stable_mosaic.version = 11 : i64} {
  func.func @_fused_split_kernel_k1(%arg0: i32, %arg1: i32, %arg2: i32, %arg3: memref<8x256xf32, #tpu.memory_space<vmem>>, %arg4: memref<256x128xf32, #tpu.memory_space<vmem>>, %arg5: memref<8x128xf32, #tpu.memory_space<vmem>>, %arg6: memref<8x128xf32, #tpu.memory_space<vmem>>) attributes {dimension_semantics = [#tpu.dimension_semantics<parallel>, #tpu.dimension_semantics<parallel>, #tpu.dimension_semantics<arbitrary>], iteration_bounds = array<i64: 1, 1, 1>, scalar_prefetch = 0 : i64, scratch_operands = 0 : i64, tpu.core_type = #tpu.core_type<tc>, window_params = [{transform_indices = @transform_0, window_bounds = array<i64: 8, 256>}, {transform_indices = @transform_1, window_bounds = array<i64: 256, 128>}, {transform_indices = @transform_2, window_bounds = array<i64: 8, 128>}, {transform_indices = @transform_3, window_bounds = array<i64: 8, 128>}]} {
    %c0 = arith.constant 0 : index
    %c0_0 = arith.constant 0 : index
    %0 = vector.load %arg3[%c0, %c0_0] : memref<8x256xf32, #tpu.memory_space<vmem>>, vector<8x256xf32>
    %c0_1 = arith.constant 0 : index
    %c0_2 = arith.constant 0 : index
    %1 = vector.load %arg4[%c0_1, %c0_2] : memref<256x128xf32, #tpu.memory_space<vmem>>, vector<256x128xf32>
    %cst = arith.constant 0.000000e+00 : f32
    %2 = vector.broadcast %cst : f32 to vector<256x128xf32>
    %3 = arith.maximumf %1, %2 : vector<256x128xf32>
    %cst_3 = arith.constant dense<0.000000e+00> : vector<8x128xf32>
    %4 = tpu.matmul %0, %3, %cst_3 {dimension_numbers = #tpu.dot_dimension_numbers<[1], [0], [0], [1], [0, 0, 1, 1], [], []>} : vector<8x256xf32>, vector<256x128xf32>, vector<8x128xf32> -> vector<8x128xf32>
    %cst_4 = arith.constant dense<0.000000e+00> : vector<8x128xf32>
    %5 = tpu.matmul %0, %1, %cst_4 {dimension_numbers = #tpu.dot_dimension_numbers<[1], [0], [0], [1], [0, 0, 1, 1], [], []>} : vector<8x256xf32>, vector<256x128xf32>, vector<8x128xf32> -> vector<8x128xf32>
    %c0_5 = arith.constant 0 : index
    %c0_6 = arith.constant 0 : index
    %6 = vector.load %arg5[%c0_5, %c0_6] : memref<8x128xf32, #tpu.memory_space<vmem>>, vector<8x128xf32>
    tpu.vector_store %arg5[%c0_5, %c0_6], %4 {strides = array<i32>} : memref<8x128xf32, #tpu.memory_space<vmem>>, vector<8x128xf32>,
    %7 = arith.subf %4, %5 : vector<8x128xf32>
    %c0_7 = arith.constant 0 : index
    %c0_8 = arith.constant 0 : index
    %8 = vector.load %arg6[%c0_7, %c0_8] : memref<8x128xf32, #tpu.memory_space<vmem>>, vector<8x128xf32>
    tpu.vector_store %arg6[%c0_7, %c0_8], %7 {strides = array<i32>} : memref<8x128xf32, #tpu.memory_space<vmem>>, vector<8x128xf32>,
    return
  }
  func.func @transform_0(%arg0: i32, %arg1: i32, %arg2: i32) -> (i32, i32) {
    %c0_i32 = arith.constant 0 : i32
    return %arg0, %arg2 : i32, i32
  }
  func.func @transform_1(%arg0: i32, %arg1: i32, %arg2: i32) -> (i32, i32) {
    %c0_i32 = arith.constant 0 : i32
    return %arg2, %arg1 : i32, i32
  }
  func.func @transform_2(%arg0: i32, %arg1: i32, %arg2: i32) -> (i32, i32) {
    %c0_i32 = arith.constant 0 : i32
    return %arg0, %arg1 : i32, i32
  }
  func.func @transform_3(%arg0: i32, %arg1: i32, %arg2: i32) -> (i32, i32) {
    %c0_i32 = arith.constant 0 : i32
    return %arg0, %arg1 : i32, i32
  }
}

</mosaic_0001>

<llo_original>
// kernel: tpu_custom_call.1
$region0: #{tpu_custom_call.1}
  #allocation0 [shape = 'u32[]', space=smem, size = 0x4, offset = 0x4, fixed_abs, tag = 'smem constant byte address 0x4 - core index']
  #allocation1 [shape = 'u32[144,128]{1,0:T(1,128)}', space=vmem, size = 0x12000, scoped, tag = 'internal scratch']
  %s0 = inlined_call_operand.hbm [shape: f32[8,256], index: 0, kind: input, shape index: {}]
  %s1 = inlined_call_operand.hbm [shape: f32[256,128], index: 1, kind: input, shape index: {}]
  %s2 = inlined_call_operand.hbm [shape: f32[8,128], index: 2, kind: output, shape index: {0}]
  %s3 = inlined_call_operand.hbm [shape: f32[8,128], index: 3, kind: output, shape index: {1}]
  %4 = xla_tuple %s2, %s3
  %s5 = sld [smem:[#allocation0]]
  $region34: #{tpu_custom_call.1} parent=0
    _
  %s7 = ssub.s32 1, %s5
  %s8 = scalar_select 0, %s7, %s5
  $region1: #{tpu_custom_call.1} parent=0
    #allocation2 [shape = 'u8[8192]{0}', space=vmem, size = 0x2000, scoped, tag = 'input window, operand 0, single buffered']
    #allocation3 [shape = 's32[1]{0}', space=sflag, size = 0x4, scoped, tag = 'scoped memory for tpu_custom_call.1']
    #allocation4 [shape = 's32[1]{0}', space=sflag, size = 0x4, scoped, tag = 'scoped memory for tpu_custom_call.1']
    #allocation5 [shape = 'u8[131072]{0}', space=vmem, size = 0x20000, scoped, tag = 'input window, operand 1, single buffered']
    #allocation6 [shape = 's32[1]{0}', space=sflag, size = 0x4, scoped, tag = 'scoped memory for tpu_custom_call.1']
    #allocation7 [shape = 'u8[4096]{0}', space=vmem, size = 0x1000, scoped, tag = 'output window, operand 0, single buffered']
    #allocation8 [shape = 'u8[4096]{0}', space=vmem, size = 0x1000, scoped, tag = 'output window, operand 1, single buffered']
    #allocation9 [shape = 's32[1]{0}', space=sflag, size = 0x4, scoped, tag = 'scoped memory for tpu_custom_call.1']
    %9 = vsyncpa [#allocation3], 0
    %10 = vsyncpa [#allocation6], 0
    %11 = vsyncpa [#allocation4], 0
    %12 = vsyncpa [#allocation9], 0
    // Predicated region
    $region2: #{tpu_custom_call.1} parent=1 // pred_check
      _
    $region3: #{tpu_custom_call.1} parent=1 // pred_check_branch
      %14 = sbr.rel (0) target = $region5
    $region4: #{tpu_custom_call.1} parent=1 // pred_region
      %s16 = ssub.s32 256, 256
      %17 = vsyncadd [#allocation3], %s16
      %s19 = sshll.u32 [#allocation2], 4
      %s20 = int_to_ptr.vmem [resolvable:$true] %s19
      %22 = dma.hbm_to_vmem [thread:$0]  %s0, 256, %s20, [#allocation3]
    $region5: #{tpu_custom_call.1} parent=1 // pred_fallthru
      _
    // Predicated region
    $region6: #{tpu_custom_call.1} parent=1 // pred_check
      _
    $region7: #{tpu_custom_call.1} parent=1 // pred_check_branch
      %24 = sbr.rel (0) target = $region9
    $region8: #{tpu_custom_call.1} parent=1 // pred_region
      %s26 = ssub.s32 4096, 4096
      %27 = vsyncadd [#allocation6], %s26
      %s28 = sshll.u32 [#allocation5], 4
      %s29 = int_to_ptr.vmem [resolvable:$true] %s28
      %34 = dma.hbm_to_vmem [thread:$0]  %s1, 4096, %s29, [#allocation6], 128, 128, 8
    $region9: #{tpu_custom_call.1} parent=1 // pred_fallthru
      _
    // Predicated region
    $region10: #{tpu_custom_call.1} parent=1 // pred_check
      _
    $region11: #{tpu_custom_call.1} parent=1 // pred_check_branch
      %36 = sbr.rel (0) target = $region13
    $region12: #{tpu_custom_call.1} parent=1 // pred_region
      %37 = dma.done [#allocation3], 256
    $region13: #{tpu_custom_call.1} parent=1 // pred_fallthru
      _
    // Predicated region
    $region14: #{tpu_custom_call.1} parent=1 // pred_check
      _
    $region15: #{tpu_custom_call.1} parent=1 // pred_check_branch
      %39 = sbr.rel (0) target = $region17
    $region16: #{tpu_custom_call.1} parent=1 // pred_region
      %40 = dma.done [#allocation6], 4096
    $region17: #{tpu_custom_call.1} parent=1 // pred_fallthru
      _
    %v41 = vld [vmem:[#allocation2] sm:$0xff]
    %v42 = vld [vmem:[#allocation2 + $0x8] sm:$0xff]
    %v43 = vld [vmem:[#allocation5] sm:$0xff]
    %v44 = vld [vmem:[#allocation5 + $0x8] sm:$0xff]
    %v45 = vld [vmem:[#allocation5 + $0x10] sm:$0xff]
    %v46 = vld [vmem:[#allocation5 + $0x18] sm:$0xff]
    %v47 = vld [vmem:[#allocation5 + $0x20] sm:$0xff]
    %v48 = vld [vmem:[#allocation5 + $0x28] sm:$0xff]
    %v49 = vld [vmem:[#allocation5 + $0x30] sm:$0xff]
    %v50 = vld [vmem:[#allocation5 + $0x38] sm:$0xff]
    %v51 = vld [vmem:[#allocation5 + $0x40] sm:$0xff]
    %v52 = vld [vmem:[#allocation5 + $0x48] sm:$0xff]
    %v53 = vld [vmem:[#allocation5 + $0x50] sm:$0xff]
    %v54 = vld [vmem:[#allocation5 + $0x58] sm:$0xff]
    %v55 = vld [vmem:[#allocation5 + $0x60] sm:$0xff]
    %v56 = vld [vmem:[#allocation5 + $0x68] sm:$0xff]
    %v57 = vld [vmem:[#allocation5 + $0x70] sm:$0xff]
    %v58 = vld [vmem:[#allocation5 + $0x78] sm:$0xff]
    %v59 = vld [vmem:[#allocation5 + $0x80] sm:$0xff]
    %v60 = vld [vmem:[#allocation5 + $0x88] sm:$0xff]
    %v61 = vld [vmem:[#allocation5 + $0x90] sm:$0xff]
    %v62 = vld [vmem:[#allocation5 + $0x98] sm:$0xff]
    %v63 = vld [vmem:[#allocation5 + $0xa0] sm:$0xff]
    %v64 = vld [vmem:[#allocation5 + $0xa8] sm:$0xff]
    %v65 = vld [vmem:[#allocation5 + $0xb0] sm:$0xff]
    %v66 = vld [vmem:[#allocation5 + $0xb8] sm:$0xff]
    %v67 = vld [vmem:[#allocation5 + $0xc0] sm:$0xff]
    %v68 = vld [vmem:[#allocation5 + $0xc8] sm:$0xff]
    %v69 = vld [vmem:[#allocation5 + $0xd0] sm:$0xff]
    %v70 = vld [vmem:[#allocation5 + $0xd8] sm:$0xff]
    %v71 = vld [vmem:[#allocation5 + $0xe0] sm:$0xff]
    %v72 = vld [vmem:[#allocation5 + $0xe8] sm:$0xff]
    %v73 = vld [vmem:[#allocation5 + $0xf0] sm:$0xff]
    %v74 = vld [vmem:[#allocation5 + $0xf8] sm:$0xff]
    %v75 = vmax.f32 %v43, 0.0
    %v76 = vmax.f32 %v44, 0.0
    %v77 = vmax.f32 %v45, 0.0
    %v78 = vmax.f32 %v46, 0.0
    %v79 = vmax.f32 %v47, 0.0
    %v80 = vmax.f32 %v48, 0.0
    %v81 = vmax.f32 %v49, 0.0
    %v82 = vmax.f32 %v50, 0.0
    %v83 = vmax.f32 %v51, 0.0
    %v84 = vmax.f32 %v52, 0.0
    %v85 = vmax.f32 %v53, 0.0
    %v86 = vmax.f32 %v54, 0.0
    %v87 = vmax.f32 %v55, 0.0
    %v88 = vmax.f32 %v56, 0.0
    %v89 = vmax.f32 %v57, 0.0
    %v90 = vmax.f32 %v58, 0.0
    %v91 = vmax.f32 %v59, 0.0
    %v92 = vmax.f32 %v60, 0.0
    %v93 = vmax.f32 %v61, 0.0
    %v94 = vmax.f32 %v62, 0.0
    %v95 = vmax.f32 %v63, 0.0
    %v96 = vmax.f32 %v64, 0.0
    %v97 = vmax.f32 %v65, 0.0
    %v98 = vmax.f32 %v66, 0.0
    %v99 = vmax.f32 %v67, 0.0
    %v100 = vmax.f32 %v68, 0.0
    %v101 = vmax.f32 %v69, 0.0
    %v102 = vmax.f32 %v70, 0.0
    %v103 = vmax.f32 %v71, 0.0
    %v104 = vmax.f32 %v72, 0.0
    %v105 = vmax.f32 %v73, 0.0
    %v106 = vmax.f32 %v74, 0.0
    %107 = vmatprep.subr.mxu0 0.0
    %108 = vmatpush1.msra.mxu0 %v75
    %109 = vmatprep.subr.mxu0 0.0
    %110 = vmatpush1.msra.mxu0 %v76
    %111 = vmatprep.subr.mxu0 0.0
    %112 = vmatpush1.msra.mxu0 %v77
    %113 = vmatprep.subr.mxu0 0.0
    %114 = vmatpush1.msra.mxu0 %v78
    %115 = vmatprep.subr.mxu0 0.0
    %116 = vmatpush1.msra.mxu0 %v79
    %117 = vmatprep.subr.mxu0 0.0
    %118 = vmatpush1.msra.mxu0 %v80
    %119 = vmatprep.subr.mxu0 0.0
    %120 = vmatpush1.msra.mxu0 %v81
    %121 = vmatprep.subr.mxu0 0.0
    %122 = vmatpush1.msra.mxu0 %v82
    %123 = vmatprep.subr.mxu0 0.0
    %124 = vmatpush1.msra.mxu0 %v83
    %125 = vmatprep.subr.mxu0 0.0
    %126 = vmatpush1.msra.mxu0 %v84
    %127 = vmatprep.subr.mxu0 0.0
    %128 = vmatpush1.msra.mxu0 %v85
    %129 = vmatprep.subr.mxu0 0.0
    %130 = vmatpush1.msra.mxu0 %v86
    %131 = vmatprep.subr.mxu0 0.0
    %132 = vmatpush1.msra.mxu0 %v87
    %133 = vmatprep.subr.mxu0 0.0
    %134 = vmatpush1.msra.mxu0 %v88
    %135 = vmatprep.subr.mxu0 0.0
    %136 = vmatpush1.msra.mxu0 %v89
    %137 = vmatprep.subr.mxu0 0.0
    %138 = vmatpush1.msra.mxu0 %v90
    %139 = vmatprep.subr.mxu0 0.0
    %140 = vmatpush1.msra.mxu0 %v91
    %141 = vmatprep.subr.mxu0 0.0
    %142 = vmatpush1.msra.mxu0 %v92
    %143 = vmatprep.subr.mxu0 0.0
    %144 = vmatpush1.msra.mxu0 %v93
    %145 = vmatprep.subr.mxu0 0.0
    %146 = vmatpush1.msra.mxu0 %v94
    %147 = vmatprep.subr.mxu0 0.0
    %148 = vmatpush1.msra.mxu0 %v95
    %149 = vmatprep.subr.mxu0 0.0
    %150 = vmatpush1.msra.mxu0 %v96
    %151 = vmatprep.subr.mxu0 0.0
    %152 = vmatpush1.msra.mxu0 %v97
    %153 = vmatprep.subr.mxu0 0.0
    %154 = vmatpush1.msra.mxu0 %v98
    %155 = vmatprep.subr.mxu0 0.0
    %156 = vmatpush1.msra.mxu0 %v99
    %157 = vmatprep.subr.mxu0 0.0
    %158 = vmatpush1.msra.mxu0 %v100
    %159 = vmatprep.subr.mxu0 0.0
    %160 = vmatpush1.msra.mxu0 %v101
    %161 = vmatprep.subr.mxu0 0.0
    %162 = vmatpush1.msra.mxu0 %v102
    %163 = vmatprep.subr.mxu0 0.0
    %164 = vmatpush1.msra.mxu0 %v103
    %165 = vmatprep.subr.mxu0 0.0
    %166 = vmatpush1.msra.mxu0 %v104
    %167 = vmatprep.subr.mxu0 0.0
    %168 = vmatpush1.msra.mxu0 %v105
    %169 = vmatprep.subr.mxu0 0.0
    %170 = vmatpush1.msra.mxu0 %v106
    %171 = vmatprep.mubr.f32.mxu0 %v42
    %172 = vmatmul.mubr.f32.gmra.mrb[0].mxu0 %v41
    %v173 = vpop.f32.mrb[0].mxu0
    %v174 = vadd.f32 0.0, %v173
    %v175 = vpop.f32.mrb[0].mxu0
    %176 = vdwg.mxu0
    %177 = vmatprep.subr.mxu0 0.0
    %178 = vmatpush1.msra.mxu0 %v43
    %179 = vmatprep.subr.mxu0 0.0
    %180 = vmatpush1.msra.mxu0 %v44
    %181 = vmatprep.subr.mxu0 0.0
    %182 = vmatpush1.msra.mxu0 %v45
    %183 = vmatprep.subr.mxu0 0.0
    %184 = vmatpush1.msra.mxu0 %v46
    %185 = vmatprep.subr.mxu0 0.0
    %186 = vmatpush1.msra.mxu0 %v47
    %187 = vmatprep.subr.mxu0 0.0
    %188 = vmatpush1.msra.mxu0 %v48
    %189 = vmatprep.subr.mxu0 0.0
    %190 = vmatpush1.msra.mxu0 %v49
    %191 = vmatprep.subr.mxu0 0.0
    %192 = vmatpush1.msra.mxu0 %v50
    %193 = vmatprep.subr.mxu0 0.0
    %194 = vmatpush1.msra.mxu0 %v51
    %195 = vmatprep.subr.mxu0 0.0
    %196 = vmatpush1.msra.mxu0 %v52
    %197 = vmatprep.subr.mxu0 0.0
    %198 = vmatpush1.msra.mxu0 %v53
    %199 = vmatprep.subr.mxu0 0.0
    %200 = vmatpush1.msra.mxu0 %v54
    %201 = vmatprep.subr.mxu0 0.0
    %202 = vmatpush1.msra.mxu0 %v55
    %203 = vmatprep.subr.mxu0 0.0
    %204 = vmatpush1.msra.mxu0 %v56
    %205 = vmatprep.subr.mxu0 0.0
    %206 = vmatpush1.msra.mxu0 %v57
    %207 = vmatprep.subr.mxu0 0.0
    %208 = vmatpush1.msra.mxu0 %v58
    %209 = vmatprep.subr.mxu0 0.0
    %210 = vmatpush1.msra.mxu0 %v59
    %211 = vmatprep.subr.mxu0 0.0
    %212 = vmatpush1.msra.mxu0 %v60
    %213 = vmatprep.subr.mxu0 0.0
    %214 = vmatpush1.msra.mxu0 %v61
    %215 = vmatprep.subr.mxu0 0.0
    %216 = vmatpush1.msra.mxu0 %v62
    %217 = vmatprep.subr.mxu0 0.0
    %218 = vmatpush1.msra.mxu0 %v63
    %219 = vmatprep.subr.mxu0 0.0
    %220 = vmatpush1.msra.mxu0 %v64
    %221 = vmatprep.subr.mxu0 0.0
    %222 = vmatpush1.msra.mxu0 %v65
    %223 = vmatprep.subr.mxu0 0.0
    %224 = vmatpush1.msra.mxu0 %v66
    %225 = vmatprep.subr.mxu0 0.0
    %226 = vmatpush1.msra.mxu0 %v67
    %227 = vmatprep.subr.mxu0 0.0
    %228 = vmatpush1.msra.mxu0 %v68
    %229 = vmatprep.subr.mxu0 0.0
    %230 = vmatpush1.msra.mxu0 %v69
    %231 = vmatprep.subr.mxu0 0.0
    %232 = vmatpush1.msra.mxu0 %v70
    %233 = vmatprep.subr.mxu0 0.0
    %234 = vmatpush1.msra.mxu0 %v71
    %235 = vmatprep.subr.mxu0 0.0
    %236 = vmatpush1.msra.mxu0 %v72
    %237 = vmatprep.subr.mxu0 0.0
    %238 = vmatpush1.msra.mxu0 %v73
    %239 = vmatprep.subr.mxu0 0.0
    %240 = vmatpush1.msra.mxu0 %v74
    %241 = vmatprep.mubr.f32.mxu0 %v42
    %242 = vmatmul.mubr.f32.gmra.mrb[0].mxu0 %v41
    %v243 = vpop.f32.mrb[0].mxu0
    %v244 = vadd.f32 0.0, %v243
    %v245 = vpop.f32.mrb[0].mxu0
    %246 = vdwg.mxu0
    %247 = vst [vmem:[#allocation7] sm:$0xff] %v174
    %v248 = vsub.f32 %v174, %v244
    %249 = vst [vmem:[#allocation8] sm:$0xff] %v248
    // Predicated region
    $region18: #{tpu_custom_call.1} parent=1 // pred_check
      _
    $region19: #{tpu_custom_call.1} parent=1 // pred_check_branch
      %251 = sbr.rel (0) target = $region21
    $region20: #{tpu_custom_call.1} parent=1 // pred_region
      %s253 = ssub.s32 128, 128
      %254 = vsyncadd [#allocation4], %s253
      %s256 = sshll.u32 [#allocation7], 4
      %s257 = int_to_ptr.vmem [resolvable:$true] %s256
      %259 = dma.vmem_to_hbm [thread:$0]  %s257, 128, %s2, [#allocation4]
    $region21: #{tpu_custom_call.1} parent=1 // pred_fallthru
      _
    // Predicated region
    $region22: #{tpu_custom_call.1} parent=1 // pred_check
      _
    $region23: #{tpu_custom_call.1} parent=1 // pred_check_branch
      %261 = sbr.rel (0) target = $region25
    $region24: #{tpu_custom_call.1} parent=1 // pred_region
      %s263 = ssub.s32 128, 128
      %264 = vsyncadd [#allocation9], %s263
      %s266 = sshll.u32 [#allocation8], 4
      %s267 = int_to_ptr.vmem [resolvable:$true] %s266
      %269 = dma.vmem_to_hbm [thread:$0]  %s267, 128, %s3, [#allocation9]
    $region25: #{tpu_custom_call.1} parent=1 // pred_fallthru
      _
    // Predicated region
    $region26: #{tpu_custom_call.1} parent=1 // pred_check
      _
    $region27: #{tpu_custom_call.1} parent=1 // pred_check_branch
      %271 = sbr.rel (0) target = $region29
    $region28: #{tpu_custom_call.1} parent=1 // pred_region
      %272 = dma.done [#allocation4], 128
    $region29: #{tpu_custom_call.1} parent=1 // pred_fallthru
      _
    // Predicated region
    $region30: #{tpu_custom_call.1} parent=1 // pred_check
      _
    $region31: #{tpu_custom_call.1} parent=1 // pred_check_branch
      %274 = sbr.rel (0) target = $region33
    $region32: #{tpu_custom_call.1} parent=1 // pred_region
      %275 = dma.done [#allocation9], 128
    $region33: #{tpu_custom_call.1} parent=1 // pred_fallthru
      _
    %276 = vsyncpa [#allocation3], 1
    %277 = vsyncpa [#allocation6], 1
    %278 = vsyncpa [#allocation4], 1
    %279 = vsyncpa [#allocation9], 1

</llo_original>
